<compile_context>
chip_gen: v7x
topology: tpu7x:2x2x1
jax: 0.10.0
libtpu: 0.0.40
codegen_flags: <defaults>
</compile_context>

<pallas_src>
import functools

import jax
import jax.numpy as jnp
from jax.experimental import pallas as pl
from jax.experimental.pallas import tpu as pltpu


def _round_up(x, m):
    return ((x + m - 1) // m) * m


def _choose_k_tile(dim_in):
    """Reduction tile: single full-K step for small / non-128-aligned K,
    otherwise the largest 128-multiple that divides K (no per-call x padding)."""
    if dim_in <= 2048 or dim_in % 128 != 0:
        return dim_in, 1
    for tk in (2048, 1024, 512, 256, 128):
        if dim_in % tk == 0:
            return tk, dim_in // tk
    return dim_in, 1  # unreachable (dim_in % 128 == 0 guarantees tk=128 hits)


def _choose_n_tile(dim_out):
    tn = min(512, _round_up(dim_out, 128))
    Np = _round_up(dim_out, tn)
    return tn, Np


def _choose_m_tile(B, grid_n):
    Mr = _round_up(B, 8)
    tm = Mr if Mr <= 256 else 256
    # v7x megacore: a (1, 1) parallel grid leaves the second TensorCore idle;
    # split M whenever there is enough batch to split.
    if grid_n == 1 and B > 8 and pl.cdiv(B, tm) == 1:
        tm = _round_up(pl.cdiv(B, 2), 8)
    return tm


def prepare_concat_linear_params(weight, bias, param_dtype=jnp.float32):
    """One-time weight preprocessing.  Call ONCE per layer, reuse every step.

    Splits the PyTorch-layout weight (dim_out, dim_in+1) into the t-column row
    and the x-weights, transposes to (dim_in, dim_out), and zero-pads only the
    N axis to a lane-dense tile multiple.  No K padding and no per-forward
    reshuffling.  param_dtype=jnp.bfloat16 halves weight/x HBM traffic on
    v6e/v7x (accumulation stays f32).
    """
    dim_out, dim_in_p1 = weight.shape
    dim_in = dim_in_p1 - 1
    tk, ksteps = _choose_k_tile(dim_in)
    tn, Np = _choose_n_tile(dim_out)

    w_t = weight.T                                  # (dim_in + 1, dim_out)
    w0 = w_t[0:1, :].astype(jnp.float32)            # (1, dim_out) t-column weights
    wr = w_t[1:, :].astype(param_dtype)             # (dim_in, dim_out)
    b = bias.reshape(1, dim_out).astype(jnp.float32)

    if Np != dim_out:                               # one-time, exact zero padding
        wr = jnp.pad(wr, ((0, 0), (0, Np - dim_out)))
        w0 = jnp.pad(w0, ((0, 0), (0, Np - dim_out)))
        b = jnp.pad(b, ((0, 0), (0, Np - dim_out)))

    return {"w0": w0, "wr": wr, "b": b,
            "dim_in": dim_in, "dim_out": dim_out,
            "tk": tk, "ksteps": ksteps, "tn": tn, "Np": Np}


def _kernel_single_k(x_ref, wr_ref, beff_ref, o_ref, *, act):
    # x_ref: (tm, K), wr_ref: (K, tn), beff_ref: (1, tn), o_ref: (tm, tn)
    out = jnp.dot(x_ref[...], wr_ref[...],
                  preferred_element_type=jnp.float32) + beff_ref[...]
    if act is not None:
        out = act(out)
    o_ref[...] = out.astype(o_ref.dtype)


def _kernel_multi_k(x_ref, wr_ref, beff_ref, o_ref, acc_ref, *, act):
    # x_ref: (tm, tk), wr_ref: (tk, tn), beff_ref: (1, tn)
    # o_ref: (tm, tn), acc_ref: f32 (tm, tn) scratch
    k = pl.program_id(2)

    @pl.when(k == 0)
    def _init():
        # Fold the t-column contribution + bias into the accumulator init.
        acc_ref[...] = jnp.broadcast_to(beff_ref[...], acc_ref.shape)

    acc_ref[...] += jnp.dot(x_ref[...], wr_ref[...],
                            preferred_element_type=jnp.float32)

    @pl.when(k == pl.num_programs(2) - 1)
    def _finalize():
        out = acc_ref[...]
        if act is not None:
            out = act(out)
        o_ref[...] = out.astype(o_ref.dtype)


def concat_linear(t, x, params, act=None):
    """Pallas ConcatLinear forward.

    Args:
      t:      scalar (python float or JAX scalar) — the time value.
      x:      (B, dim_in) float array.
      params: dict from prepare_concat_linear_params(weight, bias).
      act:    optional elementwise activation (e.g. jnp.tanh) or None.

    Returns:
      (t, y) with y of shape (B, dim_out), matching the PyTorch module.
    """
    B, dim_in = x.shape
    assert dim_in == params["dim_in"], "x feature dim does not match weights"
    dim_out = params["dim_out"]
    wr, w0, b = params["wr"], params["w0"], params["b"]
    tk, ksteps, tn, Np = params["tk"], params["ksteps"], params["tn"], params["Np"]

    grid_n = Np // tn
    tm = _choose_m_tile(B, grid_n)
    grid_m = pl.cdiv(B, tm)

    # Fold the concatenated t column + bias into one tiny (1, Np) operand.
    bias_eff = jnp.asarray(t, jnp.float32) * w0 + b

    # Match x dtype to the weights (bf16 params => fast MXU path, f32 acc).
    x_in = x if x.dtype == wr.dtype else x.astype(wr.dtype)

    x_item = jnp.dtype(x_in.dtype).itemsize
    w_item = jnp.dtype(wr.dtype).itemsize
    o_item = jnp.dtype(x.dtype).itemsize

    if ksteps > 1:
        kernel = functools.partial(_kernel_multi_k, act=act)
        grid = (grid_m, grid_n, ksteps)
        in_specs = [
            pl.BlockSpec((tm, tk), lambda i, j, k: (i, k)),   # x
            pl.BlockSpec((tk, tn), lambda i, j, k: (k, j)),   # wr
            pl.BlockSpec((1, tn), lambda i, j, k: (0, j)),    # bias_eff
        ]
        out_spec = pl.BlockSpec((tm, tn), lambda i, j, k: (i, j))
        scratch = [pltpu.VMEM((tm, tn), jnp.float32)]
        dims = ("parallel", "parallel", "arbitrary")
        scratch_bytes = tm * tn * 4
    else:
        kernel = functools.partial(_kernel_single_k, act=act)
        grid = (grid_m, grid_n)
        in_specs = [
            pl.BlockSpec((tm, tk), lambda i, j: (i, 0)),      # x (full K)
            pl.BlockSpec((tk, tn), lambda i, j: (0, j)),      # wr (full K)
            pl.BlockSpec((1, tn), lambda i, j: (0, j)),       # bias_eff
        ]
        out_spec = pl.BlockSpec((tm, tn), lambda i, j: (i, j))
        scratch = []
        dims = ("parallel", "parallel")
        scratch_bytes = 0

    # VMEM budget: double-buffered tiles + accumulator, generation-aware cap.
    vmem_est = (2 * (tm * tk * x_item + tk * tn * w_item + tn * 4)
                + 2 * tm * tn * o_item + scratch_bytes)
    try:
        vmem_cap = pltpu.get_tpu_info().vmem_capacity_bytes
    except Exception:
        vmem_cap = 64 << 20
    vmem_limit = int(min(max(2 * vmem_est, 16 << 20), int(vmem_cap * 0.6)))

    cost = pl.CostEstimate(
        flops=int(2 * B * dim_in * dim_out),
        transcendentals=int(B * dim_out) if act is not None else 0,
        bytes_accessed=int(x_in.size * x_item + wr.size * w_item
                           + bias_eff.size * 4 + B * dim_out * o_item),
    )

    y = pl.pallas_call(
        kernel,
        out_shape=jax.ShapeDtypeStruct((B, dim_out), x.dtype),
        grid_spec=pltpu.PrefetchScalarGridSpec(
            num_scalar_prefetch=0,
            grid=grid,
            in_specs=in_specs,
            out_specs=out_spec,
            scratch_shapes=scratch,
        ),
        compiler_params=pltpu.CompilerParams(
            dimension_semantics=dims,
            vmem_limit_bytes=vmem_limit,
        ),
        cost_estimate=cost,
    )(x_in, wr, bias_eff)

    return t, y


def _reference(t, x, weight, bias, act):
    B = x.shape[0]
    tt = jnp.ones((B, 1), x.dtype) * t
    ttx = jnp.concatenate([tt, x], axis=1)
    y = jnp.dot(ttx, weight.T, precision=jax.lax.Precision.HIGHEST) + bias
    return act(y) if act is not None else y


if __name__ == "__main__":
    key = jax.random.PRNGKey(0)

    def run_case(case_key, B, dim_in, dim_out, t, act,
                 param_dtype=jnp.float32, atol=1e-4, rtol=1e-4):
        k_x, k_w, k_b = jax.random.split(case_key, 3)
        bound = 1.0 / float(jnp.sqrt(dim_in + 1))
        x = jax.random.normal(k_x, (B, dim_in), dtype=jnp.float32)
        weight = jax.random.uniform(k_w, (dim_out, dim_in + 1), jnp.float32,
                                    -bound, bound)
        bias = jax.random.uniform(k_b, (dim_out,), jnp.float32, -bound, bound)

        params = prepare_concat_linear_params(weight, bias, param_dtype)  # once per layer
        t_out, y = concat_linear(t, x, params, act=act)
        jax.block_until_ready(y)

        y_ref = _reference(t, x, weight, bias, act)
        assert y.shape == (B, dim_out)
        assert jnp.allclose(y, y_ref, atol=atol, rtol=rtol), (
            f"mismatch vs reference (B={B}, dim_in={dim_in}, dim_out={dim_out}, "
            f"dtype={param_dtype})")
        return t_out

    k1, k2, k3, k4 = jax.random.split(key, 4)
    # Module-sized demo (tanh): single-K fast path, partial M/N output blocks.
    run_case(k1, B=2, dim_in=32, dim_out=32, t=0.5, act=jnp.tanh)
    # N padding + act=None + M split into two parallel programs (megacore).
    run_case(k2, B=64, dim_in=96, dim_out=160, t=0.25, act=None)
    # Multi-K accumulator path (dim_in > 2048, tk divides K, no x padding).
    run_case(k3, B=32, dim_in=2304, dim_out=64, t=1.5, act=jnp.tanh,
             atol=2e-3, rtol=2e-3)
    # bf16 weights + x (f32 accumulation), tolerance-adjusted.
    run_case(k4, B=16, dim_in=64, dim_out=64, t=0.75, act=jnp.tanh,
             param_dtype=jnp.bfloat16, atol=3e-2, rtol=3e-2)

    print("KERNEL_OK")
</pallas_src>

<mosaic_0001>
module attributes {stable_mosaic.version = 11 : i64} {
  func.func @_kernel_single_k(%arg0: i32, %arg1: i32, %arg2: memref<8x32xf32, #tpu.memory_space<vmem>>, %arg3: memref<32x128xf32, #tpu.memory_space<vmem>>, %arg4: memref<1x128xf32, #tpu.memory_space<vmem>>, %arg5: memref<8x128xf32, #tpu.memory_space<vmem>>) attributes {dimension_semantics = [#tpu.dimension_semantics<parallel>, #tpu.dimension_semantics<parallel>], iteration_bounds = array<i64: 1, 1>, scalar_prefetch = 0 : i64, scratch_operands = 0 : i64, tpu.core_type = #tpu.core_type<tc>, window_params = [{transform_indices = @transform_0, window_bounds = array<i64: 8, 32>}, {transform_indices = @transform_1, window_bounds = array<i64: 32, 128>}, {transform_indices = @transform_2, window_bounds = array<i64: 1, 128>}, {transform_indices = @transform_3, window_bounds = array<i64: 8, 128>}]} {
    %c0 = arith.constant 0 : index
    %c0_0 = arith.constant 0 : index
    %0 = vector.load %arg2[%c0, %c0_0] : memref<8x32xf32, #tpu.memory_space<vmem>>, vector<8x32xf32>
    %c0_1 = arith.constant 0 : index
    %c0_2 = arith.constant 0 : index
    %1 = vector.load %arg3[%c0_1, %c0_2] : memref<32x128xf32, #tpu.memory_space<vmem>>, vector<32x128xf32>
    %cst = arith.constant dense<0.000000e+00> : vector<8x128xf32>
    %2 = tpu.matmul %0, %1, %cst {dimension_numbers = #tpu.dot_dimension_numbers<[1], [0], [0], [1], [0, 0, 1, 1], [], []>} : vector<8x32xf32>, vector<32x128xf32>, vector<8x128xf32> -> vector<8x128xf32>
    %c0_3 = arith.constant 0 : index
    %c0_4 = arith.constant 0 : index
    %3 = vector.load %arg4[%c0_3, %c0_4] : memref<1x128xf32, #tpu.memory_space<vmem>>, vector<1x128xf32>
    %4 = vector.broadcast %3 : vector<1x128xf32> to vector<8x128xf32>
    %5 = arith.addf %2, %4 : vector<8x128xf32>
    %6 = math.tanh %5 : vector<8x128xf32>
    %c0_5 = arith.constant 0 : index
    %c0_6 = arith.constant 0 : index
    %7 = vector.load %arg5[%c0_5, %c0_6] : memref<8x128xf32, #tpu.memory_space<vmem>>, vector<8x128xf32>
    tpu.vector_store %arg5[%c0_5, %c0_6], %6 {strides = array<i32>} : memref<8x128xf32, #tpu.memory_space<vmem>>, vector<8x128xf32>,
    return
  }
  func.func @transform_0(%arg0: i32, %arg1: i32) -> (i32, i32) {
    %c0_i32 = arith.constant 0 : i32
    %c0_i32_0 = arith.constant 0 : i32
    return %arg0, %c0_i32 : i32, i32
  }
  func.func @transform_1(%arg0: i32, %arg1: i32) -> (i32, i32) {
    %c0_i32 = arith.constant 0 : i32
    %c0_i32_0 = arith.constant 0 : i32
    return %c0_i32, %arg1 : i32, i32
  }
  func.func @transform_2(%arg0: i32, %arg1: i32) -> (i32, i32) {
    %c0_i32 = arith.constant 0 : i32
    %c0_i32_0 = arith.constant 0 : i32
    return %c0_i32, %arg1 : i32, i32
  }
  func.func @transform_3(%arg0: i32, %arg1: i32) -> (i32, i32) {
    %c0_i32 = arith.constant 0 : i32
    return %arg0, %arg1 : i32, i32
  }
}

</mosaic_0001>

<llo_original>
// kernel: tpu_custom_call.1
$region0: #{tpu_custom_call.1}
  #allocation0 [shape = 'u32[]', space=smem, size = 0x4, offset = 0x4, fixed_abs, tag = 'smem constant byte address 0x4 - core index']
  #allocation1 [shape = 'u32[144,128]{1,0:T(1,128)}', space=vmem, size = 0x12000, scoped, tag = 'internal scratch']
  %s0 = inlined_call_operand.hbm [shape: f32[2,32], index: 0, kind: input, shape index: {}]
  %s1 = inlined_call_operand.hbm [shape: f32[32,128], index: 1, kind: input, shape index: {}]
  %s2 = inlined_call_operand.vmem [shape: f32[1,128], index: 2, kind: input, shape index: {}]
  %s3 = inlined_call_operand.hbm [shape: f32[2,32], index: 3, kind: output, shape index: {}]
  %s4 = sld [smem:[#allocation0]]
  $region30: #{tpu_custom_call.1} parent=0
    _
  %s6 = ssub.s32 1, %s4
  %s7 = scalar_select 0, %s6, %s4
  $region1: #{tpu_custom_call.1} parent=0
    #allocation2 [shape = 'u8[4096]{0}', space=vmem, size = 0x1000, scoped, tag = 'input window, operand 0, single buffered']
    #allocation3 [shape = 's32[1]{0}', space=sflag, size = 0x4, scoped, tag = 'scoped memory for tpu_custom_call.1']
    #allocation4 [shape = 's32[1]{0}', space=sflag, size = 0x4, scoped, tag = 'scoped memory for tpu_custom_call.1']
    #allocation5 [shape = 'u8[16384]{0}', space=vmem, size = 0x4000, scoped, tag = 'input window, operand 1, single buffered']
    #allocation6 [shape = 's32[1]{0}', space=sflag, size = 0x4, scoped, tag = 'scoped memory for tpu_custom_call.1']
    #allocation7 [shape = 'u8[4096]{0}', space=vmem, size = 0x1000, scoped, tag = 'output window, operand 0, single buffered']
    %8 = vsyncpa [#allocation3], 0
    %9 = vsyncpa [#allocation6], 0
    %10 = vsyncpa [#allocation4], 0
    // Predicated region
    $region2: #{tpu_custom_call.1} parent=1 // pred_check
      _
    $region3: #{tpu_custom_call.1} parent=1 // pred_check_branch
      %12 = sbr.rel (0) target = $region5
    $region4: #{tpu_custom_call.1} parent=1 // pred_region
      %s14 = ssub.s32 128, 32
      %15 = vsyncadd [#allocation3], %s14
      %s16 = sshll.u32 [#allocation2], 4
      %s17 = int_to_ptr.vmem [resolvable:$true] %s16
      %22 = dma.hbm_to_vmem [thread:$0]  %s0, 32, %s17, [#allocation3], 32, 32, 2
    $region5: #{tpu_custom_call.1} parent=1 // pred_fallthru
      _
    // Predicated region
    $region6: #{tpu_custom_call.1} parent=1 // pred_check
      _
    $region7: #{tpu_custom_call.1} parent=1 // pred_check_branch
      %24 = sbr.rel (0) target = $region9
    $region8: #{tpu_custom_call.1} parent=1 // pred_region
      %s26 = ssub.s32 512, 512
      %27 = vsyncadd [#allocation6], %s26
      %s28 = sshll.u32 [#allocation5], 4
      %s29 = int_to_ptr.vmem [resolvable:$true] %s28
      %34 = dma.hbm_to_vmem [thread:$0]  %s1, 512, %s29, [#allocation6], 128, 128, 8
    $region9: #{tpu_custom_call.1} parent=1 // pred_fallthru
      _
    // Predicated region
    $region10: #{tpu_custom_call.1} parent=1 // pred_check
      _
    $region11: #{tpu_custom_call.1} parent=1 // pred_check_branch
      %36 = sbr.rel (0) target = $region13
    $region12: #{tpu_custom_call.1} parent=1 // pred_region
      _
    $region13: #{tpu_custom_call.1} parent=1 // pred_fallthru
      _
    // Predicated region
    $region14: #{tpu_custom_call.1} parent=1 // pred_check
      _
    $region15: #{tpu_custom_call.1} parent=1 // pred_check_branch
      %38 = sbr.rel (0) target = $region17
    $region16: #{tpu_custom_call.1} parent=1 // pred_region
      %39 = dma.done [#allocation3], 128
    $region17: #{tpu_custom_call.1} parent=1 // pred_fallthru
      _
    // Predicated region
    $region18: #{tpu_custom_call.1} parent=1 // pred_check
      _
    $region19: #{tpu_custom_call.1} parent=1 // pred_check_branch
      %41 = sbr.rel (0) target = $region21
    $region20: #{tpu_custom_call.1} parent=1 // pred_region
      %42 = dma.done [#allocation6], 512
    $region21: #{tpu_custom_call.1} parent=1 // pred_fallthru
      _
    %v43 = vld [vmem:[#allocation2] sm:$0xff]
    %v44 = vld [vmem:[#allocation5] sm:$0xff]
    %v45 = vld [vmem:[#allocation5 + $0x8] sm:$0xff]
    %v46 = vld [vmem:[#allocation5 + $0x10] sm:$0xff]
    %v47 = vld [vmem:[#allocation5 + $0x18] sm:$0xff]
    %v48 = vld [vmem:[%s2] sm:$0x1]
    %v50 = vlaneseq
    %v51 = vshrl.u32 %v50, 7
    %v52 = vsub.s32 0, %v51
    %v53 = vrot.slane %v48, %v52
    %vm55 = vcmask 261120
    %v57 = vsel %vm55, %v43, 0
    %59 = vmatprep.subr.mxu0 0.0
    %60 = vmatpush1.msra.mxu0 %v44
    %61 = vmatprep.subr.mxu0 0.0
    %62 = vmatpush1.msra.mxu0 %v45
    %63 = vmatprep.subr.mxu0 0.0
    %64 = vmatpush1.msra.mxu0 %v46
    %65 = vmatprep.subr.mxu0 0.0
    %66 = vmatpush1.msra.mxu0 %v47
    %67 = vmatprep.subr.mxu0 0.0
    %68 = vmatpush1.msra.mxu0 0.0
    %69 = vmatprep.subr.mxu0 0.0
    %70 = vmatpush1.msra.mxu0 0.0
    %71 = vmatprep.subr.mxu0 0.0
    %72 = vmatpush1.msra.mxu0 0.0
    %73 = vmatprep.subr.mxu0 0.0
    %74 = vmatpush1.msra.mxu0 0.0
    %75 = vmatprep.subr.mxu0 0.0
    %76 = vmatpush1.msra.mxu0 0.0
    %77 = vmatprep.subr.mxu0 0.0
    %78 = vmatpush1.msra.mxu0 0.0
    %79 = vmatprep.subr.mxu0 0.0
    %80 = vmatpush1.msra.mxu0 0.0
    %81 = vmatprep.subr.mxu0 0.0
    %82 = vmatpush1.msra.mxu0 0.0
    %83 = vmatprep.subr.mxu0 0.0
    %84 = vmatpush1.msra.mxu0 0.0
    %85 = vmatprep.subr.mxu0 0.0
    %86 = vmatpush1.msra.mxu0 0.0
    %87 = vmatprep.subr.mxu0 0.0
    %88 = vmatpush1.msra.mxu0 0.0
    %89 = vmatprep.subr.mxu0 0.0
    %90 = vmatpush1.msra.mxu0 0.0
    %91 = vmatprep.subr.mxu0 0.0
    %92 = vmatpush1.msra.mxu0 0.0
    %93 = vmatprep.subr.mxu0 0.0
    %94 = vmatpush1.msra.mxu0 0.0
    %95 = vmatprep.subr.mxu0 0.0
    %96 = vmatpush1.msra.mxu0 0.0
    %97 = vmatprep.subr.mxu0 0.0
    %98 = vmatpush1.msra.mxu0 0.0
    %99 = vmatprep.subr.mxu0 0.0
    %100 = vmatpush1.msra.mxu0 0.0
    %101 = vmatprep.subr.mxu0 0.0
    %102 = vmatpush1.msra.mxu0 0.0
    %103 = vmatprep.subr.mxu0 0.0
    %104 = vmatpush1.msra.mxu0 0.0
    %105 = vmatprep.subr.mxu0 0.0
    %106 = vmatpush1.msra.mxu0 0.0
    %107 = vmatprep.subr.mxu0 0.0
    %108 = vmatpush1.msra.mxu0 0.0
    %109 = vmatprep.subr.mxu0 0.0
    %110 = vmatpush1.msra.mxu0 0.0
    %111 = vmatprep.subr.mxu0 0.0
    %112 = vmatpush1.msra.mxu0 0.0
    %113 = vmatprep.subr.mxu0 0.0
    %114 = vmatpush1.msra.mxu0 0.0
    %115 = vmatprep.subr.mxu0 0.0
    %116 = vmatpush1.msra.mxu0 0.0
    %117 = vmatprep.subr.mxu0 0.0
    %118 = vmatpush1.msra.mxu0 0.0
    %119 = vmatprep.subr.mxu0 0.0
    %120 = vmatpush1.msra.mxu0 0.0
    %121 = vmatprep.subr.mxu0 0.0
    %122 = vmatpush1.msra.mxu0 0.0
    %123 = vmatprep.mubr.f32.mxu0 0.0
    %124 = vmatmul.mubr.f32.gmra.mrb[0].mxu0 %v57
    %v125 = vpop.f32.mrb[0].mxu0
    %v126 = vadd.f32 %v53, %v125
    %v127 = vpop.f32.mrb[0].mxu0
    %128 = vdwg.mxu0
    %v129 = vtanh.pop %v126
    %130 = vst [vmem:[#allocation7] sm:$0xff] %v129
    // Predicated region
    $region22: #{tpu_custom_call.1} parent=1 // pred_check
      _
    $region23: #{tpu_custom_call.1} parent=1 // pred_check_branch
      %132 = sbr.rel (0) target = $region25
    $region24: #{tpu_custom_call.1} parent=1 // pred_region
      %s134 = ssub.s32 128, 32
      %135 = vsyncadd [#allocation4], %s134
      %s136 = sshll.u32 [#allocation7], 4
      %s137 = int_to_ptr.vmem [resolvable:$true] %s136
      %142 = dma.vmem_to_hbm [thread:$0]  %s137, 32, %s3, [#allocation4], 32, 32, 2
    $region25: #{tpu_custom_call.1} parent=1 // pred_fallthru
      _
    // Predicated region
    $region26: #{tpu_custom_call.1} parent=1 // pred_check
      _
    $region27: #{tpu_custom_call.1} parent=1 // pred_check_branch
      %144 = sbr.rel (0) target = $region29
    $region28: #{tpu_custom_call.1} parent=1 // pred_region
      %145 = dma.done [#allocation4], 128
    $region29: #{tpu_custom_call.1} parent=1 // pred_fallthru
      _
    %146 = vsyncpa [#allocation3], 1
    %147 = vsyncpa [#allocation6], 1
    %148 = vsyncpa [#allocation4], 1

</llo_original>
